<compile_context>
chip_gen: v5e
topology: v5e:2x2
jax: 0.10.0
libtpu: 0.0.40
codegen_flags: <defaults>
</compile_context>

<pallas_src>
import functools

import jax
import jax.numpy as jnp
from jax import lax
from jax.experimental import pallas as pl
from jax.experimental.pallas import tpu as pltpu

_STATE_LANES = 128  # lane-dense softmax-state scratch (avoids 1-lane vld/vst)


def _flash_attn_kernel(q_ref, k_ref, v_ref, o_ref, m_scr, l_scr, acc_scr, *,
                       seq_len, block_kv, mask_kv_tail):
    kv_idx = pl.program_id(1)

    @pl.when(kv_idx == 0)
    def _():
        m_scr[...] = jnp.full_like(m_scr, -jnp.inf)
        l_scr[...] = jnp.zeros_like(l_scr)
        acc_scr[...] = jnp.zeros_like(acc_scr)

    # scores = q @ k^T: operands stay in the input dtype (bf16 MXU rate when
    # inputs are bf16); accumulate in f32.  Contracting dim 1 of both operands
    # avoids materializing any transpose.
    s = lax.dot_general(q_ref[...], k_ref[...], (((1,), (1,)), ((), ())),
                        preferred_element_type=jnp.float32)          # [tq, tk]

    if mask_kv_tail:
        # Only generated when the kv axis was padded up to a tile multiple.
        col = kv_idx * block_kv + lax.broadcasted_iota(jnp.int32, s.shape, 1)
        s = jnp.where(col < seq_len, s, -jnp.inf)

    # NOTE: the attention mask argument is intentionally NOT applied — the
    # reference's masked_fill is non-in-place and its result is discarded.

    # Online (flash) softmax across kv tiles; state kept in f32 (safe on v5e
    # which has no bf16 VPU/EUP), lane-dense across 128 lanes.
    m_prev = m_scr[...]                                               # [tq, L]
    m_new = jnp.maximum(m_prev, jnp.max(s, axis=1, keepdims=True))    # [tq, L]
    alpha = jnp.exp(m_prev - m_new)                                   # [tq, L]
    p = jnp.exp(s - m_new[:, 0:1])                                    # [tq, tk]
    l_scr[...] = alpha * l_scr[...] + jnp.sum(p, axis=1, keepdims=True)
    acc_scr[...] = alpha[:, 0:1] * acc_scr[...] + jnp.dot(
        p.astype(v_ref.dtype), v_ref[...], preferred_element_type=jnp.float32)
    m_scr[...] = m_new

    @pl.when(kv_idx == pl.num_programs(1) - 1)
    def _():
        inv_l = pl.reciprocal(l_scr[...], approx=True)                # EUP, ~free
        o_ref[...] = (acc_scr[...] * inv_l[:, 0:1]).astype(o_ref.dtype)


def _round_up(a, b):
    return (a + b - 1) // b * b


@functools.partial(jax.jit, static_argnames=("block_q", "block_kv"))
def masked_self_attention(token_encoding, w_q, w_k, w_v, mask=None, *,
                          block_q=256, block_kv=256):
    """token_encoding: [S, D]; w_q/w_k/w_v: [D, D] in PyTorch [out, in] layout.

    `mask` is accepted for signature parity but (faithfully to the reference's
    non-in-place, discarded masked_fill) has no effect on the output.
    """
    del mask  # see faithfulness note above
    S, D = token_encoding.shape
    dtype = token_encoding.dtype
    scale = 1.0 / (float(D) ** 0.5)

    # --- Projections: once, in the wrapper (clean lane-dense XLA matmuls),
    # instead of re-projecting K/V for every q-block inside the kernel.
    x = token_encoding
    q = (jnp.dot(x, w_q.T, preferred_element_type=jnp.float32) * scale).astype(dtype)
    k = jnp.dot(x, w_k.T, preferred_element_type=jnp.float32).astype(dtype)
    v = jnp.dot(x, w_v.T, preferred_element_type=jnp.float32).astype(dtype)

    # --- Tile sizes: sublane-aligned (multiple of 8), capped at seq length.
    # Defaults (256) match the v6e/v7x MXU; pass block_*=128 on v5e if needed.
    tq = min(block_q, _round_up(S, 8))
    tk = min(block_kv, _round_up(S, 8))
    s_q = _round_up(S, tq)
    s_k = _round_up(S, tk)
    if s_q != S:
        q = jnp.pad(q, ((0, s_q - S), (0, 0)))
    if s_k != S:
        k = jnp.pad(k, ((0, s_k - S), (0, 0)))
        v = jnp.pad(v, ((0, s_k - S), (0, 0)))
    grid = (s_q // tq, s_k // tk)

    kernel = functools.partial(_flash_attn_kernel, seq_len=S, block_kv=tk,
                               mask_kv_tail=(s_k != S))

    itemsize = jnp.dtype(dtype).itemsize
    # Double-buffered q/k/v/out tiles + f32 accumulator + lane-dense m/l state.
    resident = (2 * (tq * D + 2 * tk * D + tq * D) * itemsize
                + tq * D * 4 + 2 * tq * _STATE_LANES * 4)
    # Explicit scoped-VMEM budget with headroom (cap below v7x's 64 MiB).
    vmem_limit = int(min(60 * 2**20, max(32 * 2**20, 2 * resident)))

    cost = pl.CostEstimate(
        flops=4 * s_q * s_k * D,                       # QK^T + PV
        transcendentals=s_q * s_k,                     # exp
        bytes_accessed=(2 * s_q * D + 2 * s_k * D) * itemsize)

    out = pl.pallas_call(
        kernel,
        out_shape=jax.ShapeDtypeStruct((s_q, D), dtype),
        grid_spec=pltpu.PrefetchScalarGridSpec(
            num_scalar_prefetch=0,
            grid=grid,
            in_specs=[
                pl.BlockSpec((tq, D), lambda i, j: (i, 0)),   # Q tile
                pl.BlockSpec((tk, D), lambda i, j: (j, 0)),   # K tile
                pl.BlockSpec((tk, D), lambda i, j: (j, 0)),   # V tile
                # (pipeline_mode=pl.Buffered(3) on K/V is a further knob if
                #  profiling shows exposed DMA on the kv axis.)
            ],
            out_specs=pl.BlockSpec((tq, D), lambda i, j: (i, 0)),
            scratch_shapes=[
                pltpu.VMEM((tq, _STATE_LANES), jnp.float32),  # running max
                pltpu.VMEM((tq, _STATE_LANES), jnp.float32),  # running denom
                pltpu.VMEM((tq, D), jnp.float32),             # output accumulator
            ],
        ),
        compiler_params=pltpu.CompilerParams(
            dimension_semantics=("parallel", "arbitrary"),
            vmem_limit_bytes=vmem_limit,
        ),
        cost_estimate=cost,
    )(q, k, v)

    return out[:S] if s_q != S else out


def _reference(token_encoding, w_q, w_k, w_v):
    x = token_encoding.astype(jnp.float32)
    q = x @ w_q.T
    k = x @ w_k.T
    v = x @ w_v.T
    sims = (q @ k.T) / jnp.sqrt(jnp.float32(k.shape[1]))
    p = jax.nn.softmax(sims, axis=1)
    return p @ v


if __name__ == "__main__":
    key = jax.random.PRNGKey(0)
    keys = jax.random.split(key, 8)

    # --- Case 1: small shapes implied by the module (seq=8, d_model=32).
    SEQ, D_MODEL = 8, 32
    bound = 1.0 / (D_MODEL ** 0.5)
    w_q = jax.random.uniform(keys[0], (D_MODEL, D_MODEL), jnp.float32, -bound, bound)
    w_k = jax.random.uniform(keys[1], (D_MODEL, D_MODEL), jnp.float32, -bound, bound)
    w_v = jax.random.uniform(keys[2], (D_MODEL, D_MODEL), jnp.float32, -bound, bound)
    token_encoding = jax.random.normal(keys[3], (SEQ, D_MODEL), jnp.float32)

    out = jax.block_until_ready(
        masked_self_attention(token_encoding, w_q, w_k, w_v))
    ref = _reference(token_encoding, w_q, w_k, w_v)
    assert out.shape == (SEQ, D_MODEL)
    # Tolerance loosened for the approx (EUP) reciprocal in the softmax denom.
    assert jnp.allclose(out, ref, atol=2e-3, rtol=2e-3), "case 1 mismatch"

    # --- Case 2: multi-block grid with a padded/masked kv tail (S % block != 0).
    SEQ2, D2 = 136, 32
    bound2 = 1.0 / (D2 ** 0.5)
    w_q2 = jax.random.uniform(keys[4], (D2, D2), jnp.float32, -bound2, bound2)
    w_k2 = jax.random.uniform(keys[5], (D2, D2), jnp.float32, -bound2, bound2)
    w_v2 = jax.random.uniform(keys[6], (D2, D2), jnp.float32, -bound2, bound2)
    x2 = jax.random.normal(keys[7], (SEQ2, D2), jnp.float32)

    out2 = jax.block_until_ready(
        masked_self_attention(x2, w_q2, w_k2, w_v2, block_q=64, block_kv=64))
    ref2 = _reference(x2, w_q2, w_k2, w_v2)
    assert out2.shape == (SEQ2, D2)
    assert jnp.allclose(out2, ref2, atol=2e-3, rtol=2e-3), "case 2 mismatch"

    print("KERNEL_OK")
</pallas_src>

<mosaic_0001>
module attributes {stable_mosaic.version = 11 : i64} {
  func.func @_flash_attn_kernel(%arg0: i32, %arg1: i32, %arg2: memref<8x32xf32, #tpu.memory_space<vmem>>, %arg3: memref<8x32xf32, #tpu.memory_space<vmem>>, %arg4: memref<8x32xf32, #tpu.memory_space<vmem>>, %arg5: memref<8x32xf32, #tpu.memory_space<vmem>>, %arg6: memref<8x128xf32, #tpu.memory_space<vmem>>, %arg7: memref<8x128xf32, #tpu.memory_space<vmem>>, %arg8: memref<8x32xf32, #tpu.memory_space<vmem>>) attributes {dimension_semantics = [#tpu.dimension_semantics<parallel>, #tpu.dimension_semantics<arbitrary>], iteration_bounds = array<i64: 1, 1>, scalar_prefetch = 0 : i64, scratch_operands = 3 : i64, tpu.core_type = #tpu.core_type<tc>, window_params = [{transform_indices = @transform_0, window_bounds = array<i64: 8, 32>}, {transform_indices = @transform_1, window_bounds = array<i64: 8, 32>}, {transform_indices = @transform_2, window_bounds = array<i64: 8, 32>}, {transform_indices = @transform_3, window_bounds = array<i64: 8, 32>}]} {
    %c0_i32 = arith.constant 0 : i32
    %0 = arith.cmpi eq, %arg1, %c0_i32 : i32
    %1 = arith.extui %0 : i1 to i32
    %c0_i32_0 = arith.constant 0 : i32
    %2 = arith.cmpi ne, %1, %c0_i32_0 : i32
    scf.if %2 {
      %cst_23 = arith.constant 0xFF800000 : f32
      %36 = vector.broadcast %cst_23 : f32 to vector<8x128xf32>
      %c0_24 = arith.constant 0 : index
      %c0_25 = arith.constant 0 : index
      %37 = vector.load %arg6[%c0_24, %c0_25] : memref<8x128xf32, #tpu.memory_space<vmem>>, vector<8x128xf32>
      tpu.vector_store %arg6[%c0_24, %c0_25], %36 {strides = array<i32>} : memref<8x128xf32, #tpu.memory_space<vmem>>, vector<8x128xf32>,
      %cst_26 = arith.constant 0.000000e+00 : f32
      %38 = vector.broadcast %cst_26 : f32 to vector<8x128xf32>
      %c0_27 = arith.constant 0 : index
      %c0_28 = arith.constant 0 : index
      %39 = vector.load %arg7[%c0_27, %c0_28] : memref<8x128xf32, #tpu.memory_space<vmem>>, vector<8x128xf32>
      tpu.vector_store %arg7[%c0_27, %c0_28], %38 {strides = array<i32>} : memref<8x128xf32, #tpu.memory_space<vmem>>, vector<8x128xf32>,
      %cst_29 = arith.constant 0.000000e+00 : f32
      %40 = vector.broadcast %cst_29 : f32 to vector<8x32xf32>
      %c0_30 = arith.constant 0 : index
      %c0_31 = arith.constant 0 : index
      %41 = vector.load %arg8[%c0_30, %c0_31] : memref<8x32xf32, #tpu.memory_space<vmem>>, vector<8x32xf32>
      tpu.vector_store %arg8[%c0_30, %c0_31], %40 {strides = array<i32>} : memref<8x32xf32, #tpu.memory_space<vmem>>, vector<8x32xf32>,
    } else {
    }
    %c0 = arith.constant 0 : index
    %c0_1 = arith.constant 0 : index
    %3 = vector.load %arg2[%c0, %c0_1] : memref<8x32xf32, #tpu.memory_space<vmem>>, vector<8x32xf32>
    %c0_2 = arith.constant 0 : index
    %c0_3 = arith.constant 0 : index
    %4 = vector.load %arg3[%c0_2, %c0_3] : memref<8x32xf32, #tpu.memory_space<vmem>>, vector<8x32xf32>
    %cst = arith.constant dense<0.000000e+00> : vector<8x8xf32>
    %5 = tpu.matmul %3, %4, %cst {dimension_numbers = #tpu.dot_dimension_numbers<[1], [1], [0], [0], [0, 0, 1, 0], [], []>} : vector<8x32xf32>, vector<8x32xf32>, vector<8x8xf32> -> vector<8x8xf32>
    %c0_4 = arith.constant 0 : index
    %c0_5 = arith.constant 0 : index
    %6 = vector.load %arg6[%c0_4, %c0_5] : memref<8x128xf32, #tpu.memory_space<vmem>>, vector<8x128xf32>
    %cst_6 = arith.constant dense<0xFF800000> : vector<8xf32>
    %7 = vector.multi_reduction <maximumf>, %5, %cst_6 [1] : vector<8x8xf32> to vector<8xf32>
    %8 = vector.shape_cast %7 : vector<8xf32> to vector<8x1xf32>
    %9 = vector.broadcast %8 : vector<8x1xf32> to vector<8x128xf32>
    %10 = arith.maximumf %6, %9 : vector<8x128xf32>
    %11 = arith.subf %6, %10 : vector<8x128xf32>
    %12 = math.exp %11 : vector<8x128xf32>
    %13 = vector.extract_strided_slice %10 {offsets = [0, 0], sizes = [8, 1], strides = [1, 1]} : vector<8x128xf32> to vector<8x1xf32>
    %14 = vector.broadcast %13 : vector<8x1xf32> to vector<8x8xf32>
    %15 = arith.subf %5, %14 : vector<8x8xf32>
    %16 = math.exp %15 : vector<8x8xf32>
    %c0_7 = arith.constant 0 : index
    %c0_8 = arith.constant 0 : index
    %17 = vector.load %arg7[%c0_7, %c0_8] : memref<8x128xf32, #tpu.memory_space<vmem>>, vector<8x128xf32>
    %18 = arith.mulf %12, %17 : vector<8x128xf32>
    %cst_9 = arith.constant dense<0.000000e+00> : vector<8xf32>
    %19 = vector.multi_reduction <add>, %16, %cst_9 [1] : vector<8x8xf32> to vector<8xf32>
    %20 = vector.shape_cast %19 : vector<8xf32> to vector<8x1xf32>
    %21 = vector.broadcast %20 : vector<8x1xf32> to vector<8x128xf32>
    %22 = arith.addf %18, %21 : vector<8x128xf32>
    %c0_10 = arith.constant 0 : index
    %c0_11 = arith.constant 0 : index
    %23 = vector.load %arg7[%c0_10, %c0_11] : memref<8x128xf32, #tpu.memory_space<vmem>>, vector<8x128xf32>
    tpu.vector_store %arg7[%c0_10, %c0_11], %22 {strides = array<i32>} : memref<8x128xf32, #tpu.memory_space<vmem>>, vector<8x128xf32>,
    %24 = vector.extract_strided_slice %12 {offsets = [0, 0], sizes = [8, 1], strides = [1, 1]} : vector<8x128xf32> to vector<8x1xf32>
    %c0_12 = arith.constant 0 : index
    %c0_13 = arith.constant 0 : index
    %25 = vector.load %arg8[%c0_12, %c0_13] : memref<8x32xf32, #tpu.memory_space<vmem>>, vector<8x32xf32>
    %26 = vector.broadcast %24 : vector<8x1xf32> to vector<8x32xf32>
    %27 = arith.mulf %26, %25 : vector<8x32xf32>
    %c0_14 = arith.constant 0 : index
    %c0_15 = arith.constant 0 : index
    %28 = vector.load %arg4[%c0_14, %c0_15] : memref<8x32xf32, #tpu.memory_space<vmem>>, vector<8x32xf32>
    %cst_16 = arith.constant dense<0.000000e+00> : vector<8x32xf32>
    %29 = tpu.matmul %16, %28, %cst_16 {dimension_numbers = #tpu.dot_dimension_numbers<[1], [0], [0], [1], [0, 0, 1, 1], [], []>} : vector<8x8xf32>, vector<8x32xf32>, vector<8x32xf32> -> vector<8x32xf32>
    %30 = arith.addf %27, %29 : vector<8x32xf32>
    %c0_17 = arith.constant 0 : index
    %c0_18 = arith.constant 0 : index
    %31 = vector.load %arg8[%c0_17, %c0_18] : memref<8x32xf32, #tpu.memory_space<vmem>>, vector<8x32xf32>
    tpu.vector_store %arg8[%c0_17, %c0_18], %30 {strides = array<i32>} : memref<8x32xf32, #tpu.memory_space<vmem>>, vector<8x32xf32>,
    %c0_19 = arith.constant 0 : index
    %c0_20 = arith.constant 0 : index
    %32 = vector.load %arg6[%c0_19, %c0_20] : memref<8x128xf32, #tpu.memory_space<vmem>>, vector<8x128xf32>
    tpu.vector_store %arg6[%c0_19, %c0_20], %10 {strides = array<i32>} : memref<8x128xf32, #tpu.memory_space<vmem>>, vector<8x128xf32>,
    %c0_i32_21 = arith.constant 0 : i32
    %33 = arith.cmpi eq, %arg1, %c0_i32_21 : i32
    %34 = arith.extui %33 : i1 to i32
    %c0_i32_22 = arith.constant 0 : i32
    %35 = arith.cmpi ne, %34, %c0_i32_22 : i32
    scf.if %35 {
      %c0_23 = arith.constant 0 : index
      %c0_24 = arith.constant 0 : index
      %36 = vector.load %arg7[%c0_23, %c0_24] : memref<8x128xf32, #tpu.memory_space<vmem>>, vector<8x128xf32>
      %37 = tpu.reciprocal %36 {approx = true} : vector<8x128xf32> -> vector<8x128xf32>
      %c0_25 = arith.constant 0 : index
      %c0_26 = arith.constant 0 : index
      %38 = vector.load %arg8[%c0_25, %c0_26] : memref<8x32xf32, #tpu.memory_space<vmem>>, vector<8x32xf32>
      %39 = vector.extract_strided_slice %37 {offsets = [0, 0], sizes = [8, 1], strides = [1, 1]} : vector<8x128xf32> to vector<8x1xf32>
      %40 = vector.broadcast %39 : vector<8x1xf32> to vector<8x32xf32>
      %41 = arith.mulf %38, %40 : vector<8x32xf32>
      %c0_27 = arith.constant 0 : index
      %c0_28 = arith.constant 0 : index
      %42 = vector.load %arg5[%c0_27, %c0_28] : memref<8x32xf32, #tpu.memory_space<vmem>>, vector<8x32xf32>
      tpu.vector_store %arg5[%c0_27, %c0_28], %41 {strides = array<i32>} : memref<8x32xf32, #tpu.memory_space<vmem>>, vector<8x32xf32>,
    } else {
    }
    return
  }
  func.func @transform_0(%arg0: i32, %arg1: i32) -> (i32, i32) {
    %c0_i32 = arith.constant 0 : i32
    %c0_i32_0 = arith.constant 0 : i32
    return %arg0, %c0_i32 : i32, i32
  }
  func.func @transform_1(%arg0: i32, %arg1: i32) -> (i32, i32) {
    %c0_i32 = arith.constant 0 : i32
    %c0_i32_0 = arith.constant 0 : i32
    return %arg1, %c0_i32 : i32, i32
  }
  func.func @transform_2(%arg0: i32, %arg1: i32) -> (i32, i32) {
    %c0_i32 = arith.constant 0 : i32
    %c0_i32_0 = arith.constant 0 : i32
    return %arg1, %c0_i32 : i32, i32
  }
  func.func @transform_3(%arg0: i32, %arg1: i32) -> (i32, i32) {
    %c0_i32 = arith.constant 0 : i32
    %c0_i32_0 = arith.constant 0 : i32
    return %arg0, %c0_i32 : i32, i32
  }
}

</mosaic_0001>

<llo_original>
// kernel: masked_self_attention.1
$region0: #{masked_self_attention.1}
  #allocation0 [shape = 'u32[]', space=smem, size = 0x4, offset = 0x4, fixed_abs, tag = 'smem constant byte address 0x4 - core index']
  #allocation1 [shape = 'u32[72,128]{1,0:T(1,128)}', space=vmem, size = 0x9000, scoped, tag = 'internal scratch']
  #allocation2 [shape = 'f32[8,128]{1,0:T(8,128)}', space=vmem, size = 0x1000, scoped, tag = 'scratch operand']
  #allocation3 [shape = 'f32[8,128]{1,0:T(8,128)}', space=vmem, size = 0x1000, scoped, tag = 'scratch operand']
  #allocation4 [shape = 'f32[8,32]{1,0:T(8,128)}', space=vmem, size = 0x1000, scoped, tag = 'scratch operand']
  %s0 = inlined_call_operand.vmem [shape: f32[8,32], index: 0, kind: input, shape index: {}]
  %s1 = inlined_call_operand.vmem [shape: f32[8,32], index: 1, kind: input, shape index: {}]
  %s2 = inlined_call_operand.vmem [shape: f32[8,32], index: 2, kind: input, shape index: {}]
  %s3 = inlined_call_operand.hbm [shape: f32[8,32], index: 3, kind: output, shape index: {}]
  %s4 = sld [smem:[#allocation0]]
  $region30: #{masked_self_attention.1} parent=0
    _
  %s6 = ssub.s32 1, %s4
  %s7 = scalar_select 0, %s6, %s4
  $region1: #{masked_self_attention.1} parent=0
    #allocation5 [shape = 'u8[4096]{0}', space=vmem, size = 0x1000, scoped, tag = 'output window, operand 0, single buffered']
    #allocation6 [shape = 's32[1]{0}', space=sflag, size = 0x4, scoped, tag = 'scoped memory for masked_self_attention.1']
    %8 = vsyncpa [#allocation6], 0
    // Predicated region
    $region2: #{masked_self_attention.1} parent=1 // pred_check
      _
    $region3: #{masked_self_attention.1} parent=1 // pred_check_branch
      %10 = sbr.rel (0) target = $region5
    $region4: #{masked_self_attention.1} parent=1 // pred_region
      _
    $region5: #{masked_self_attention.1} parent=1 // pred_fallthru
      _
    // Predicated region
    $region6: #{masked_self_attention.1} parent=1 // pred_check
      _
    $region7: #{masked_self_attention.1} parent=1 // pred_check_branch
      %12 = sbr.rel (0) target = $region9
    $region8: #{masked_self_attention.1} parent=1 // pred_region
      _
    $region9: #{masked_self_attention.1} parent=1 // pred_fallthru
      _
    // Predicated region
    $region10: #{masked_self_attention.1} parent=1 // pred_check
      _
    $region11: #{masked_self_attention.1} parent=1 // pred_check_branch
      %14 = sbr.rel (0) target = $region13
    $region12: #{masked_self_attention.1} parent=1 // pred_region
      _
    $region13: #{masked_self_attention.1} parent=1 // pred_fallthru
      _
    %p15 = scmp.eq.s32.totalorder 0, 0
    // Predicated region
    $region14: #{masked_self_attention.1} parent=1 // pred_check
      %p16 = pneg %p15
    $region15: #{masked_self_attention.1} parent=1 // pred_check_branch
      %18 = sbr.rel (%p16) target = $region17
    $region16: #{masked_self_attention.1} parent=1 // pred_region
      %19 = vst [vmem:[#allocation2] sm:$0xff] -inf
      %20 = vst [vmem:[#allocation3] sm:$0xff] 0.0
      %vm21 = vcmask 261120
      %22 = vst.msk [vmem:[#allocation4] sm:$0xff] %vm21, 0.0
    $region17: #{masked_self_attention.1} parent=1 // pred_fallthru
      _
    %v23 = vld [vmem:[%s0] sm:$0xff]
    %v24 = vld [vmem:[%s1] sm:$0xff]
    %vm25 = vcmask 261120
    %v27 = vsel %vm25, %v23, 0
    %v30 = vsel %vm25, %v24, 0
    %32 = vmatpush.xpose.msra.mxu0 0.0
    %33 = vmatpush.xpose.msra.mxu0 0.0
    %34 = vmatpush.xpose.msra.mxu0 0.0
    %35 = vmatpush.xpose.msra.mxu0 0.0
    %36 = vmatpush.xpose.msra.mxu0 0.0
    %37 = vmatpush.xpose.msra.mxu0 0.0
    %38 = vmatpush.xpose.msra.mxu0 0.0
    %39 = vmatpush.xpose.msra.mxu0 0.0
    %40 = vmatpush.xpose.msra.mxu0 0.0
    %41 = vmatpush.xpose.msra.mxu0 0.0
    %42 = vmatpush.xpose.msra.mxu0 0.0
    %43 = vmatpush.xpose.msra.mxu0 0.0
    %44 = vmatpush.xpose.msra.mxu0 0.0
    %45 = vmatpush.xpose.msra.mxu0 0.0
    %46 = vmatpush.xpose.msra.mxu0 0.0
    %47 = vmatpush.xpose.msra.mxu0 %v30
    %48 = vmatmul.f32.gmra.mxu0 %v27
    %v49 = vpop.f32.mrf.mxu0
    %v50 = vadd.f32 0.0, %v49
    %51 = vdwg.mxu0
    %v52 = vld [vmem:[#allocation2] sm:$0xff]
    %vm53 = vcmask 64512
    %v54 = vsel %vm53, %v50, -inf
    %55 = vmax.xlane.f32.xlu0 %v54
    %v56 = vpop.xlane.xlu0 %55
    %v57 = vmax.f32 %v52, %v56
    %v58 = vsub.f32 %v52, %v57
    %v59 = vmul.f32 %v58, 1.442695
    %v60 = vpow.pop %v59
    %62 = vset.pattern.permute.xlu0 0
    %63 = vperm.xlu0 %62, %v57
    %v64 = vpop.permute.xlu0 %63
    %v66 = vsub.f32 %v50, %v64
    %v67 = vmul.f32 %v66, 1.442695
    %v68 = vpow.pop %v67
    %v69 = vld [vmem:[#allocation3] sm:$0xff]
    %v70 = vmul.f32 %v60, %v69
    %v71 = vsel %vm53, %v68, 0.0
    %72 = vadd.xlane.f32.xlu0 %v71
    %v73 = vpop.xlane.xlu0 %72
    %v74 = vadd.f32 %v70, %v73
    %75 = vst [vmem:[#allocation3] sm:$0xff] %v74
    %v76 = vld [vmem:[#allocation4] sm:$0xff]
    %78 = vset.pattern.permute.xlu0 0
    %79 = vperm.xlu0 %78, %v60
    %v80 = vpop.permute.xlu0 %79
    %v82 = vmul.f32 %v80, %v76
    %v83 = vld [vmem:[%s2] sm:$0xff]
    %v85 = vsel %vm53, %v68, 0
    %87 = vmatpush.msra.mxu0 0.0
    %88 = vmatpush.msra.mxu0 0.0
    %89 = vmatpush.msra.mxu0 0.0
    %90 = vmatpush.msra.mxu0 0.0
    %91 = vmatpush.msra.mxu0 0.0
    %92 = vmatpush.msra.mxu0 0.0
    %93 = vmatpush.msra.mxu0 0.0
    %94 = vmatpush.msra.mxu0 0.0
    %95 = vmatpush.msra.mxu0 0.0
    %96 = vmatpush.msra.mxu0 0.0
    %97 = vmatpush.msra.mxu0 0.0
    %98 = vmatpush.msra.mxu0 0.0
    %99 = vmatpush.msra.mxu0 0.0
    %100 = vmatpush.msra.mxu0 0.0
    %101 = vmatpush.msra.mxu0 0.0
    %102 = vmatpush.msra.mxu0 %v83
    %103 = vmatmul.f32.gmra.mxu0 %v85
    %v104 = vpop.f32.mrf.mxu0
    %v105 = vadd.f32 0.0, %v104
    %106 = vdwg.mxu0
    %v107 = vadd.f32 %v82, %v105
    %108 = vst.msk [vmem:[#allocation4] sm:$0xff] %vm25, %v107
    %109 = vst [vmem:[#allocation2] sm:$0xff] %v57
    // Predicated region
    $region18: #{masked_self_attention.1} parent=1 // pred_check
      %p110 = pneg %p15
    $region19: #{masked_self_attention.1} parent=1 // pred_check_branch
      %112 = sbr.rel (%p110) target = $region21
    $region20: #{masked_self_attention.1} parent=1 // pred_region
      %v113 = vld [vmem:[#allocation3] sm:$0xff]
      %v114 = vrcp.pop %v113
      %v115 = vld [vmem:[#allocation4] sm:$0xff]
      %117 = vset.pattern.permute.xlu0 0
      %118 = vperm.xlu0 %117, %v114
      %v119 = vpop.permute.xlu0 %118
      %v121 = vmul.f32 %v115, %v119
      %122 = vst.msk [vmem:[#allocation5] sm:$0xff] %vm25, %v121
    $region21: #{masked_self_attention.1} parent=1 // pred_fallthru
      _
    // Predicated region
    $region22: #{masked_self_attention.1} parent=1 // pred_check
      _
    $region23: #{masked_self_attention.1} parent=1 // pred_check_branch
      %124 = sbr.rel (0) target = $region25
    $region24: #{masked_self_attention.1} parent=1 // pred_region
      %126 = vsyncadd [#allocation6], 0
      %s128 = sshll.u32 [#allocation5], 4
      %s129 = int_to_ptr.vmem [resolvable:$true] %s128
      %s130 = sshll.u32 %s3, 4
      %s131 = int_to_ptr.hbm [resolvable:$true] %s130
      %133 = dma.vmem_to_hbm [thread:$0]  %s129, 128, %s131, [#allocation6]
    $region25: #{masked_self_attention.1} parent=1 // pred_fallthru
      _
    // Predicated region
    $region26: #{masked_self_attention.1} parent=1 // pred_check
      _
    $region27: #{masked_self_attention.1} parent=1 // pred_check_branch
      %135 = sbr.rel (0) target = $region29
    $region28: #{masked_self_attention.1} parent=1 // pred_region
      %137 = dma.done [#allocation6], 128
    $region29: #{masked_self_attention.1} parent=1 // pred_fallthru
      _
    %138 = vsyncpa [#allocation6], 1

</llo_original>
